<compile_context>
chip_gen: v7x
topology: tpu7x:2x2x1
jax: 0.10.0
libtpu: 0.0.40
codegen_flags: <defaults>
</compile_context>

<pallas_src>
import functools

import jax
import jax.numpy as jnp
from jax.experimental import pallas as pl
from jax.experimental.pallas import tpu as pltpu

_N_ACC = 4           # independent select accumulators (break VALU dep chain)
_UNROLL_LIMIT = 256  # fully unroll the entry scan up to this table size
_UNROLL = 8          # fori_loop body unroll for larger tables


def _round_up(v, m):
    return -(-v // m) * m


def _discrete_factor_kernel(flat_ref, w_ref, o_ref, *, w_total):
    # flat_ref: (1, R, 128) int32 flattened table index per sample (-1 = pad)
    # w_ref:    (w_pad,)    f32   flattened factor table, resident in SMEM
    # o_ref:    (1, R, 128) f32   lane-dense output
    flat = flat_ref[0]                                   # (R, 128)

    # Gather-as-select: splat each scalar weight from SMEM and select it where
    # the flat index matches.  Multiple accumulators keep the VALU slots full.
    accs = [jnp.zeros(flat.shape, dtype=jnp.float32) for _ in range(_N_ACC)]

    if w_total <= _UNROLL_LIMIT:
        # Small factor tables (the common case): fully unrolled scan.
        for e in range(w_total):
            a = e % _N_ACC
            accs[a] = jnp.where(flat == e, w_ref[e], accs[a])
    else:
        # Larger tables: loop over groups of _UNROLL entries, unrolled body.
        # w_ref is padded to a multiple of _UNROLL with zeros; padded entries
        # can never match a valid flat index, so they are harmless.
        # TODO(synk): for very large tables, move the table to a lane-dense
        # VMEM buffer and use a chunked one-hot (bf16) MXU contraction.
        n_groups = -(-w_total // _UNROLL)

        def body(g, accs_t):
            new = list(accs_t)
            base = g * _UNROLL
            for u in range(_UNROLL):
                a = u % _N_ACC
                e = base + u
                new[a] = jnp.where(flat == e, w_ref[e], new[a])
            return tuple(new)

        accs = list(jax.lax.fori_loop(0, n_groups, body, tuple(accs)))

    out = accs[0]
    for a in accs[1:]:
        out = out + a
    o_ref[0] = out


def discrete_factor_forward(x, weights, *, max_tile_rows=1024):
    """x: (S, K) integer sample assignments; weights: K-dim table (float32)."""
    S, K = x.shape
    domain_lengths = weights.shape
    assert len(domain_lengths) == K

    # Row-major strides of the weight table (static Python ints).
    strides = []
    total = 1
    for d in reversed(domain_lengths):
        strides.append(total)
        total *= d
    strides = tuple(reversed(strides))
    w_total = total

    # ---- Sample tiling: samples split into (rows, 128 lanes). -------------
    max_tile_rows = max(8, _round_up(max_tile_rows, 8))
    rows = -(-S // 128)
    rows8 = _round_up(max(rows, 1), 8)
    tile_rows = min(max_tile_rows, rows8)
    n_tiles = -(-rows8 // tile_rows)
    # v7x megacore: prefer >= 2 grid steps, but only when each half still has
    # plenty of work (>= 32 rows); never produce tile_rows < 8.
    if n_tiles == 1 and tile_rows >= 64:
        tile_rows = _round_up(tile_rows // 2, 8)
        n_tiles = -(-rows8 // tile_rows)
    s_pad = n_tiles * tile_rows * 128

    # ---- Flat index precomputed in the wrapper (4 bytes/sample into kernel).
    x = x.astype(jnp.int32)
    strides_arr = jnp.asarray(strides, dtype=jnp.int32)           # (K,)
    flat = jnp.sum(x * strides_arr[None, :], axis=-1).astype(jnp.int32)  # (S,)
    if s_pad != S:
        flat = jnp.concatenate(
            [flat, jnp.full((s_pad - S,), -1, dtype=jnp.int32)], axis=0)
    flat_tiled = flat.reshape(n_tiles, tile_rows, 128)  # contiguous view

    # Flattened weight table lives in SMEM (scalar-indexed reads), padded to a
    # multiple of the loop unroll so dynamic reads never go out of bounds.
    w_flat = jnp.asarray(weights, dtype=jnp.float32).reshape(-1)
    w_pad = _round_up(w_total, _UNROLL)
    if w_pad != w_total:
        w_flat = jnp.concatenate(
            [w_flat, jnp.zeros((w_pad - w_total,), dtype=jnp.float32)], axis=0)

    kernel = functools.partial(_discrete_factor_kernel, w_total=w_total)

    cost = pl.CostEstimate(
        flops=2 * s_pad * w_total,
        transcendentals=0,
        bytes_accessed=s_pad * 4 + w_pad * 4 + s_pad * 4,
    )

    out = pl.pallas_call(
        kernel,
        out_shape=jax.ShapeDtypeStruct((n_tiles, tile_rows, 128), jnp.float32),
        grid_spec=pltpu.PrefetchScalarGridSpec(
            num_scalar_prefetch=0,
            grid=(n_tiles,),
            in_specs=[
                pl.BlockSpec((1, tile_rows, 128), lambda i: (i, 0, 0)),
                pl.BlockSpec(memory_space=pltpu.MemorySpace.SMEM),
            ],
            out_specs=pl.BlockSpec((1, tile_rows, 128), lambda i: (i, 0, 0)),
        ),
        compiler_params=pltpu.CompilerParams(
            dimension_semantics=("parallel",)),
        cost_estimate=cost,
    )(flat_tiled, w_flat)

    return out.reshape(-1)[:S]


if __name__ == "__main__":
    key = jax.random.PRNGKey(0)
    k_w, k_x = jax.random.split(key)

    # Three discrete random variables with domain sizes 4, 3, 2.
    domain_lengths = (4, 3, 2)
    K = len(domain_lengths)
    S = 256  # number of sample worlds

    # Deterministic synthetic weight table (the module's __init__ uses a
    # constant fill; random values make the test meaningful).
    weights = jax.random.uniform(k_w, domain_lengths, dtype=jnp.float32)

    # Integer sample assignments, one column per random variable.
    cols = []
    xkeys = jax.random.split(k_x, K)
    for j, d in enumerate(domain_lengths):
        cols.append(jax.random.randint(xkeys[j], (S, 1), 0, d, dtype=jnp.int32))
    x = jnp.concatenate(cols, axis=1)  # (S, K) int32

    out = discrete_factor_forward(x, weights)
    out = jax.block_until_ready(out)

    # Pure-JAX reference: weights[x[:,0], x[:,1], x[:,2]]
    ref = weights[tuple(x[:, j] for j in range(K))]

    assert out.shape == (S,)
    assert jnp.allclose(out, ref, atol=1e-6, rtol=1e-6), "mismatch vs reference"
    print("KERNEL_OK")
</pallas_src>

<mosaic_0001>
module attributes {stable_mosaic.version = 11 : i64} {
  func.func @_discrete_factor_kernel(%arg0: i32, %arg1: memref<1x8x128xi32, #tpu.memory_space<vmem>>, %arg2: memref<24xf32, #tpu.memory_space<smem>>, %arg3: memref<1x8x128xf32, #tpu.memory_space<vmem>>) attributes {dimension_semantics = [#tpu.dimension_semantics<parallel>], iteration_bounds = array<i64: 1>, scalar_prefetch = 0 : i64, scratch_operands = 0 : i64, tpu.core_type = #tpu.core_type<tc>, window_params = [{transform_indices = @transform_0, window_bounds = array<i64: 1, 8, 128>}, {transform_indices = @transform_1, window_bounds = array<i64: 24>}, {transform_indices = @transform_2, window_bounds = array<i64: 1, 8, 128>}]} {
    %c0 = arith.constant 0 : index
    %c0_0 = arith.constant 0 : index
    %c0_1 = arith.constant 0 : index
    %0 = vector.load %arg1[%c0, %c0_0, %c0_1] : memref<1x8x128xi32, #tpu.memory_space<vmem>>, vector<1x8x128xi32>
    %1 = vector.shape_cast %0 : vector<1x8x128xi32> to vector<8x128xi32>
    %cst = arith.constant 0.000000e+00 : f32
    %2 = vector.broadcast %cst : f32 to vector<8x128xf32>
    %cst_2 = arith.constant 0.000000e+00 : f32
    %3 = vector.broadcast %cst_2 : f32 to vector<8x128xf32>
    %cst_3 = arith.constant 0.000000e+00 : f32
    %4 = vector.broadcast %cst_3 : f32 to vector<8x128xf32>
    %cst_4 = arith.constant 0.000000e+00 : f32
    %5 = vector.broadcast %cst_4 : f32 to vector<8x128xf32>
    %c0_i32 = arith.constant 0 : i32
    %6 = vector.broadcast %c0_i32 : i32 to vector<8x128xi32>
    %7 = arith.cmpi eq, %1, %6 : vector<8x128xi32>
    %c0_5 = arith.constant 0 : index
    %8 = memref.load %arg2[%c0_5] : memref<24xf32, #tpu.memory_space<smem>>
    %9 = vector.broadcast %8 : f32 to vector<8x128xf32>
    %10 = arith.select %7, %9, %2 : vector<8x128xi1>, vector<8x128xf32>
    %c1_i32 = arith.constant 1 : i32
    %11 = vector.broadcast %c1_i32 : i32 to vector<8x128xi32>
    %12 = arith.cmpi eq, %1, %11 : vector<8x128xi32>
    %c1 = arith.constant 1 : index
    %13 = memref.load %arg2[%c1] : memref<24xf32, #tpu.memory_space<smem>>
    %14 = vector.broadcast %13 : f32 to vector<8x128xf32>
    %15 = arith.select %12, %14, %3 : vector<8x128xi1>, vector<8x128xf32>
    %c2_i32 = arith.constant 2 : i32
    %16 = vector.broadcast %c2_i32 : i32 to vector<8x128xi32>
    %17 = arith.cmpi eq, %1, %16 : vector<8x128xi32>
    %c2 = arith.constant 2 : index
    %18 = memref.load %arg2[%c2] : memref<24xf32, #tpu.memory_space<smem>>
    %19 = vector.broadcast %18 : f32 to vector<8x128xf32>
    %20 = arith.select %17, %19, %4 : vector<8x128xi1>, vector<8x128xf32>
    %c3_i32 = arith.constant 3 : i32
    %21 = vector.broadcast %c3_i32 : i32 to vector<8x128xi32>
    %22 = arith.cmpi eq, %1, %21 : vector<8x128xi32>
    %c3 = arith.constant 3 : index
    %23 = memref.load %arg2[%c3] : memref<24xf32, #tpu.memory_space<smem>>
    %24 = vector.broadcast %23 : f32 to vector<8x128xf32>
    %25 = arith.select %22, %24, %5 : vector<8x128xi1>, vector<8x128xf32>
    %c4_i32 = arith.constant 4 : i32
    %26 = vector.broadcast %c4_i32 : i32 to vector<8x128xi32>
    %27 = arith.cmpi eq, %1, %26 : vector<8x128xi32>
    %c4 = arith.constant 4 : index
    %28 = memref.load %arg2[%c4] : memref<24xf32, #tpu.memory_space<smem>>
    %29 = vector.broadcast %28 : f32 to vector<8x128xf32>
    %30 = arith.select %27, %29, %10 : vector<8x128xi1>, vector<8x128xf32>
    %c5_i32 = arith.constant 5 : i32
    %31 = vector.broadcast %c5_i32 : i32 to vector<8x128xi32>
    %32 = arith.cmpi eq, %1, %31 : vector<8x128xi32>
    %c5 = arith.constant 5 : index
    %33 = memref.load %arg2[%c5] : memref<24xf32, #tpu.memory_space<smem>>
    %34 = vector.broadcast %33 : f32 to vector<8x128xf32>
    %35 = arith.select %32, %34, %15 : vector<8x128xi1>, vector<8x128xf32>
    %c6_i32 = arith.constant 6 : i32
    %36 = vector.broadcast %c6_i32 : i32 to vector<8x128xi32>
    %37 = arith.cmpi eq, %1, %36 : vector<8x128xi32>
    %c6 = arith.constant 6 : index
    %38 = memref.load %arg2[%c6] : memref<24xf32, #tpu.memory_space<smem>>
    %39 = vector.broadcast %38 : f32 to vector<8x128xf32>
    %40 = arith.select %37, %39, %20 : vector<8x128xi1>, vector<8x128xf32>
    %c7_i32 = arith.constant 7 : i32
    %41 = vector.broadcast %c7_i32 : i32 to vector<8x128xi32>
    %42 = arith.cmpi eq, %1, %41 : vector<8x128xi32>
    %c7 = arith.constant 7 : index
    %43 = memref.load %arg2[%c7] : memref<24xf32, #tpu.memory_space<smem>>
    %44 = vector.broadcast %43 : f32 to vector<8x128xf32>
    %45 = arith.select %42, %44, %25 : vector<8x128xi1>, vector<8x128xf32>
    %c8_i32 = arith.constant 8 : i32
    %46 = vector.broadcast %c8_i32 : i32 to vector<8x128xi32>
    %47 = arith.cmpi eq, %1, %46 : vector<8x128xi32>
    %c8 = arith.constant 8 : index
    %48 = memref.load %arg2[%c8] : memref<24xf32, #tpu.memory_space<smem>>
    %49 = vector.broadcast %48 : f32 to vector<8x128xf32>
    %50 = arith.select %47, %49, %30 : vector<8x128xi1>, vector<8x128xf32>
    %c9_i32 = arith.constant 9 : i32
    %51 = vector.broadcast %c9_i32 : i32 to vector<8x128xi32>
    %52 = arith.cmpi eq, %1, %51 : vector<8x128xi32>
    %c9 = arith.constant 9 : index
    %53 = memref.load %arg2[%c9] : memref<24xf32, #tpu.memory_space<smem>>
    %54 = vector.broadcast %53 : f32 to vector<8x128xf32>
    %55 = arith.select %52, %54, %35 : vector<8x128xi1>, vector<8x128xf32>
    %c10_i32 = arith.constant 10 : i32
    %56 = vector.broadcast %c10_i32 : i32 to vector<8x128xi32>
    %57 = arith.cmpi eq, %1, %56 : vector<8x128xi32>
    %c10 = arith.constant 10 : index
    %58 = memref.load %arg2[%c10] : memref<24xf32, #tpu.memory_space<smem>>
    %59 = vector.broadcast %58 : f32 to vector<8x128xf32>
    %60 = arith.select %57, %59, %40 : vector<8x128xi1>, vector<8x128xf32>
    %c11_i32 = arith.constant 11 : i32
    %61 = vector.broadcast %c11_i32 : i32 to vector<8x128xi32>
    %62 = arith.cmpi eq, %1, %61 : vector<8x128xi32>
    %c11 = arith.constant 11 : index
    %63 = memref.load %arg2[%c11] : memref<24xf32, #tpu.memory_space<smem>>
    %64 = vector.broadcast %63 : f32 to vector<8x128xf32>
    %65 = arith.select %62, %64, %45 : vector<8x128xi1>, vector<8x128xf32>
    %c12_i32 = arith.constant 12 : i32
    %66 = vector.broadcast %c12_i32 : i32 to vector<8x128xi32>
    %67 = arith.cmpi eq, %1, %66 : vector<8x128xi32>
    %c12 = arith.constant 12 : index
    %68 = memref.load %arg2[%c12] : memref<24xf32, #tpu.memory_space<smem>>
    %69 = vector.broadcast %68 : f32 to vector<8x128xf32>
    %70 = arith.select %67, %69, %50 : vector<8x128xi1>, vector<8x128xf32>
    %c13_i32 = arith.constant 13 : i32
    %71 = vector.broadcast %c13_i32 : i32 to vector<8x128xi32>
    %72 = arith.cmpi eq, %1, %71 : vector<8x128xi32>
    %c13 = arith.constant 13 : index
    %73 = memref.load %arg2[%c13] : memref<24xf32, #tpu.memory_space<smem>>
    %74 = vector.broadcast %73 : f32 to vector<8x128xf32>
    %75 = arith.select %72, %74, %55 : vector<8x128xi1>, vector<8x128xf32>
    %c14_i32 = arith.constant 14 : i32
    %76 = vector.broadcast %c14_i32 : i32 to vector<8x128xi32>
    %77 = arith.cmpi eq, %1, %76 : vector<8x128xi32>
    %c14 = arith.constant 14 : index
    %78 = memref.load %arg2[%c14] : memref<24xf32, #tpu.memory_space<smem>>
    %79 = vector.broadcast %78 : f32 to vector<8x128xf32>
    %80 = arith.select %77, %79, %60 : vector<8x128xi1>, vector<8x128xf32>
    %c15_i32 = arith.constant 15 : i32
    %81 = vector.broadcast %c15_i32 : i32 to vector<8x128xi32>
    %82 = arith.cmpi eq, %1, %81 : vector<8x128xi32>
    %c15 = arith.constant 15 : index
    %83 = memref.load %arg2[%c15] : memref<24xf32, #tpu.memory_space<smem>>
    %84 = vector.broadcast %83 : f32 to vector<8x128xf32>
    %85 = arith.select %82, %84, %65 : vector<8x128xi1>, vector<8x128xf32>
    %c16_i32 = arith.constant 16 : i32
    %86 = vector.broadcast %c16_i32 : i32 to vector<8x128xi32>
    %87 = arith.cmpi eq, %1, %86 : vector<8x128xi32>
    %c16 = arith.constant 16 : index
    %88 = memref.load %arg2[%c16] : memref<24xf32, #tpu.memory_space<smem>>
    %89 = vector.broadcast %88 : f32 to vector<8x128xf32>
    %90 = arith.select %87, %89, %70 : vector<8x128xi1>, vector<8x128xf32>
    %c17_i32 = arith.constant 17 : i32
    %91 = vector.broadcast %c17_i32 : i32 to vector<8x128xi32>
    %92 = arith.cmpi eq, %1, %91 : vector<8x128xi32>
    %c17 = arith.constant 17 : index
    %93 = memref.load %arg2[%c17] : memref<24xf32, #tpu.memory_space<smem>>
    %94 = vector.broadcast %93 : f32 to vector<8x128xf32>
    %95 = arith.select %92, %94, %75 : vector<8x128xi1>, vector<8x128xf32>
    %c18_i32 = arith.constant 18 : i32
    %96 = vector.broadcast %c18_i32 : i32 to vector<8x128xi32>
    %97 = arith.cmpi eq, %1, %96 : vector<8x128xi32>
    %c18 = arith.constant 18 : index
    %98 = memref.load %arg2[%c18] : memref<24xf32, #tpu.memory_space<smem>>
    %99 = vector.broadcast %98 : f32 to vector<8x128xf32>
    %100 = arith.select %97, %99, %80 : vector<8x128xi1>, vector<8x128xf32>
    %c19_i32 = arith.constant 19 : i32
    %101 = vector.broadcast %c19_i32 : i32 to vector<8x128xi32>
    %102 = arith.cmpi eq, %1, %101 : vector<8x128xi32>
    %c19 = arith.constant 19 : index
    %103 = memref.load %arg2[%c19] : memref<24xf32, #tpu.memory_space<smem>>
    %104 = vector.broadcast %103 : f32 to vector<8x128xf32>
    %105 = arith.select %102, %104, %85 : vector<8x128xi1>, vector<8x128xf32>
    %c20_i32 = arith.constant 20 : i32
    %106 = vector.broadcast %c20_i32 : i32 to vector<8x128xi32>
    %107 = arith.cmpi eq, %1, %106 : vector<8x128xi32>
    %c20 = arith.constant 20 : index
    %108 = memref.load %arg2[%c20] : memref<24xf32, #tpu.memory_space<smem>>
    %109 = vector.broadcast %108 : f32 to vector<8x128xf32>
    %110 = arith.select %107, %109, %90 : vector<8x128xi1>, vector<8x128xf32>
    %c21_i32 = arith.constant 21 : i32
    %111 = vector.broadcast %c21_i32 : i32 to vector<8x128xi32>
    %112 = arith.cmpi eq, %1, %111 : vector<8x128xi32>
    %c21 = arith.constant 21 : index
    %113 = memref.load %arg2[%c21] : memref<24xf32, #tpu.memory_space<smem>>
    %114 = vector.broadcast %113 : f32 to vector<8x128xf32>
    %115 = arith.select %112, %114, %95 : vector<8x128xi1>, vector<8x128xf32>
    %c22_i32 = arith.constant 22 : i32
    %116 = vector.broadcast %c22_i32 : i32 to vector<8x128xi32>
    %117 = arith.cmpi eq, %1, %116 : vector<8x128xi32>
    %c22 = arith.constant 22 : index
    %118 = memref.load %arg2[%c22] : memref<24xf32, #tpu.memory_space<smem>>
    %119 = vector.broadcast %118 : f32 to vector<8x128xf32>
    %120 = arith.select %117, %119, %100 : vector<8x128xi1>, vector<8x128xf32>
    %c23_i32 = arith.constant 23 : i32
    %121 = vector.broadcast %c23_i32 : i32 to vector<8x128xi32>
    %122 = arith.cmpi eq, %1, %121 : vector<8x128xi32>
    %c23 = arith.constant 23 : index
    %123 = memref.load %arg2[%c23] : memref<24xf32, #tpu.memory_space<smem>>
    %124 = vector.broadcast %123 : f32 to vector<8x128xf32>
    %125 = arith.select %122, %124, %105 : vector<8x128xi1>, vector<8x128xf32>
    %126 = arith.addf %110, %115 : vector<8x128xf32>
    %127 = arith.addf %126, %120 : vector<8x128xf32>
    %128 = arith.addf %127, %125 : vector<8x128xf32>
    %c0_6 = arith.constant 0 : index
    %c0_7 = arith.constant 0 : index
    %c0_8 = arith.constant 0 : index
    %129 = vector.load %arg3[%c0_6, %c0_7, %c0_8] : memref<1x8x128xf32, #tpu.memory_space<vmem>>, vector<1x8x128xf32>
    %130 = vector.shape_cast %129 : vector<1x8x128xf32> to vector<8x128xf32>
    %131 = vector.shape_cast %128 : vector<8x128xf32> to vector<1x8x128xf32>
    tpu.vector_store %arg3[%c0_6, %c0_7, %c0_8], %131 {strides = array<i32>} : memref<1x8x128xf32, #tpu.memory_space<vmem>>, vector<1x8x128xf32>,
    return
  }
  func.func @transform_0(%arg0: i32) -> (i32, i32, i32) {
    %c0_i32 = arith.constant 0 : i32
    %c0_i32_0 = arith.constant 0 : i32
    %c0_i32_1 = arith.constant 0 : i32
    return %arg0, %c0_i32, %c0_i32_0 : i32, i32, i32
  }
  func.func @transform_1(%arg0: i32) -> i32 {
    %c0_i32 = arith.constant 0 : i32
    %c0_i32_0 = arith.constant 0 : i32
    return %c0_i32 : i32
  }
  func.func @transform_2(%arg0: i32) -> (i32, i32, i32) {
    %c0_i32 = arith.constant 0 : i32
    %c0_i32_0 = arith.constant 0 : i32
    %c0_i32_1 = arith.constant 0 : i32
    return %arg0, %c0_i32, %c0_i32_0 : i32, i32, i32
  }
}

</mosaic_0001>

<llo_original>
// kernel: tpu_custom_call.1
$region0: #{tpu_custom_call.1}
  #allocation0 [shape = 'u32[]', space=smem, size = 0x4, offset = 0x4, fixed_abs, tag = 'smem constant byte address 0x4 - core index']
  #allocation1 [shape = 'u32[144,128]{1,0:T(1,128)}', space=vmem, size = 0x12000, scoped, tag = 'internal scratch']
  %s0 = inlined_call_operand.hbm [shape: s32[1,8,128], index: 0, kind: input, shape index: {}]
  %s1 = inlined_call_operand.vmem [shape: f32[24], index: 1, kind: input, shape index: {}]
  %s2 = inlined_call_operand.hbm [shape: f32[1,8,128], index: 2, kind: output, shape index: {}]
  %s3 = sld [smem:[#allocation0]]
  $region26: #{tpu_custom_call.1} parent=0
    _
  %s5 = ssub.s32 1, %s3
  %s6 = scalar_select 0, %s5, %s3
  $region1: #{tpu_custom_call.1} parent=0
    #allocation2 [shape = 'u8[4096]{0}', space=vmem, size = 0x1000, scoped, tag = 'input window, operand 0, single buffered']
    #allocation3 [shape = 's32[1]{0}', space=sflag, size = 0x4, scoped, tag = 'scoped memory for tpu_custom_call.1']
    #allocation4 [shape = 's32[1]{0}', space=sflag, size = 0x4, scoped, tag = 'scoped memory for tpu_custom_call.1']
    #allocation5 [shape = 's32[1]{0}', space=sflag, size = 0x4, scoped, tag = 'scoped memory for tpu_custom_call.1']
    #allocation6 [shape = 'u8[512]{0}', space=smem, size = 0x200, scoped, tag = 'input window, operand 1, single buffered']
    #allocation7 [shape = 'u8[4096]{0}', space=vmem, size = 0x1000, scoped, tag = 'output window, operand 0, single buffered']
    %7 = vsyncpa [#allocation3], 0
    %8 = vsyncpa [#allocation5], 0
    %9 = vsyncpa [#allocation4], 0
    // Predicated region
    $region2: #{tpu_custom_call.1} parent=1 // pred_check
      _
    $region3: #{tpu_custom_call.1} parent=1 // pred_check_branch
      %11 = sbr.rel (0) target = $region5
    $region4: #{tpu_custom_call.1} parent=1 // pred_region
      %s13 = ssub.s32 128, 128
      %14 = vsyncadd [#allocation3], %s13
      %s16 = sshll.u32 [#allocation2], 4
      %s17 = int_to_ptr.vmem [resolvable:$true] %s16
      %19 = dma.hbm_to_vmem [thread:$0]  %s0, 128, %s17, [#allocation3]
    $region5: #{tpu_custom_call.1} parent=1 // pred_fallthru
      _
    // Predicated region
    $region6: #{tpu_custom_call.1} parent=1 // pred_check
      _
    $region7: #{tpu_custom_call.1} parent=1 // pred_check_branch
      %21 = sbr.rel (0) target = $region9
    $region8: #{tpu_custom_call.1} parent=1 // pred_region
      %s23 = ssub.s32 16, 16
      %24 = vsyncadd [#allocation5], %s23
      %s26 = sshll.u32 %s1, 4
      %s27 = int_to_ptr.vmem [resolvable:$true] %s26
      %29 = dma.vmem_to_smem %s27, 16, [#allocation6], [#allocation5]
    $region9: #{tpu_custom_call.1} parent=1 // pred_fallthru
      _
    // Predicated region
    $region10: #{tpu_custom_call.1} parent=1 // pred_check
      _
    $region11: #{tpu_custom_call.1} parent=1 // pred_check_branch
      %31 = sbr.rel (0) target = $region13
    $region12: #{tpu_custom_call.1} parent=1 // pred_region
      %32 = dma.done [#allocation3], 128
    $region13: #{tpu_custom_call.1} parent=1 // pred_fallthru
      _
    // Predicated region
    $region14: #{tpu_custom_call.1} parent=1 // pred_check
      _
    $region15: #{tpu_custom_call.1} parent=1 // pred_check_branch
      %34 = sbr.rel (0) target = $region17
    $region16: #{tpu_custom_call.1} parent=1 // pred_region
      %35 = dma.done [#allocation5], 16
    $region17: #{tpu_custom_call.1} parent=1 // pred_fallthru
      _
    %36 = sfence
    %v37 = vld [vmem:[#allocation2] sm:$0xff]
    %vm38 = vcmp.eq.s32.totalorder %v37, 0
    %s39 = sld [smem:[#allocation6]]
    %v40 = vstv %s39
    %v41 = vsel %vm38, %v40, 0.0
    %vm42 = vcmp.eq.s32.totalorder %v37, 1
    %s43 = sld [smem:[#allocation6 + $0x1]]
    %v44 = vstv %s43
    %v45 = vsel %vm42, %v44, 0.0
    %vm46 = vcmp.eq.s32.totalorder %v37, 2
    %s47 = sld [smem:[#allocation6 + $0x2]]
    %v48 = vstv %s47
    %v49 = vsel %vm46, %v48, 0.0
    %vm50 = vcmp.eq.s32.totalorder %v37, 3
    %s51 = sld [smem:[#allocation6 + $0x3]]
    %v52 = vstv %s51
    %v53 = vsel %vm50, %v52, 0.0
    %vm54 = vcmp.eq.s32.totalorder %v37, 4
    %s55 = sld [smem:[#allocation6 + $0x4]]
    %v56 = vstv %s55
    %v57 = vsel %vm54, %v56, %v41
    %vm58 = vcmp.eq.s32.totalorder %v37, 5
    %s59 = sld [smem:[#allocation6 + $0x5]]
    %v60 = vstv %s59
    %v61 = vsel %vm58, %v60, %v45
    %vm62 = vcmp.eq.s32.totalorder %v37, 6
    %s63 = sld [smem:[#allocation6 + $0x6]]
    %v64 = vstv %s63
    %v65 = vsel %vm62, %v64, %v49
    %vm66 = vcmp.eq.s32.totalorder %v37, 7
    %s67 = sld [smem:[#allocation6 + $0x7]]
    %v68 = vstv %s67
    %v69 = vsel %vm66, %v68, %v53
    %vm70 = vcmp.eq.s32.totalorder %v37, 8
    %s71 = sld [smem:[#allocation6 + $0x8]]
    %v72 = vstv %s71
    %v73 = vsel %vm70, %v72, %v57
    %vm74 = vcmp.eq.s32.totalorder %v37, 9
    %s75 = sld [smem:[#allocation6 + $0x9]]
    %v76 = vstv %s75
    %v77 = vsel %vm74, %v76, %v61
    %vm78 = vcmp.eq.s32.totalorder %v37, 10
    %s79 = sld [smem:[#allocation6 + $0xa]]
    %v80 = vstv %s79
    %v81 = vsel %vm78, %v80, %v65
    %vm82 = vcmp.eq.s32.totalorder %v37, 11
    %s83 = sld [smem:[#allocation6 + $0xb]]
    %v84 = vstv %s83
    %v85 = vsel %vm82, %v84, %v69
    %vm86 = vcmp.eq.s32.totalorder %v37, 12
    %s87 = sld [smem:[#allocation6 + $0xc]]
    %v88 = vstv %s87
    %v89 = vsel %vm86, %v88, %v73
    %vm90 = vcmp.eq.s32.totalorder %v37, 13
    %s91 = sld [smem:[#allocation6 + $0xd]]
    %v92 = vstv %s91
    %v93 = vsel %vm90, %v92, %v77
    %vm94 = vcmp.eq.s32.totalorder %v37, 14
    %s95 = sld [smem:[#allocation6 + $0xe]]
    %v96 = vstv %s95
    %v97 = vsel %vm94, %v96, %v81
    %vm98 = vcmp.eq.s32.totalorder %v37, 15
    %s99 = sld [smem:[#allocation6 + $0xf]]
    %v100 = vstv %s99
    %v101 = vsel %vm98, %v100, %v85
    %vm102 = vcmp.eq.s32.totalorder %v37, 16
    %s103 = sld [smem:[#allocation6 + $0x10]]
    %v104 = vstv %s103
    %v105 = vsel %vm102, %v104, %v89
    %vm106 = vcmp.eq.s32.totalorder %v37, 17
    %s107 = sld [smem:[#allocation6 + $0x11]]
    %v108 = vstv %s107
    %v109 = vsel %vm106, %v108, %v93
    %vm110 = vcmp.eq.s32.totalorder %v37, 18
    %s111 = sld [smem:[#allocation6 + $0x12]]
    %v112 = vstv %s111
    %v113 = vsel %vm110, %v112, %v97
    %vm114 = vcmp.eq.s32.totalorder %v37, 19
    %s115 = sld [smem:[#allocation6 + $0x13]]
    %v116 = vstv %s115
    %v117 = vsel %vm114, %v116, %v101
    %vm118 = vcmp.eq.s32.totalorder %v37, 20
    %s119 = sld [smem:[#allocation6 + $0x14]]
    %v120 = vstv %s119
    %v121 = vsel %vm118, %v120, %v105
    %vm122 = vcmp.eq.s32.totalorder %v37, 21
    %s123 = sld [smem:[#allocation6 + $0x15]]
    %v124 = vstv %s123
    %v125 = vsel %vm122, %v124, %v109
    %vm126 = vcmp.eq.s32.totalorder %v37, 22
    %s127 = sld [smem:[#allocation6 + $0x16]]
    %v128 = vstv %s127
    %v129 = vsel %vm126, %v128, %v113
    %vm130 = vcmp.eq.s32.totalorder %v37, 23
    %s131 = sld [smem:[#allocation6 + $0x17]]
    %v132 = vstv %s131
    %v133 = vsel %vm130, %v132, %v117
    %v134 = vadd.f32 %v121, %v125
    %v135 = vadd.f32 %v134, %v129
    %v136 = vadd.f32 %v135, %v133
    %137 = vst [vmem:[#allocation7] sm:$0xff] %v136
    // Predicated region
    $region18: #{tpu_custom_call.1} parent=1 // pred_check
      _
    $region19: #{tpu_custom_call.1} parent=1 // pred_check_branch
      %139 = sbr.rel (0) target = $region21
    $region20: #{tpu_custom_call.1} parent=1 // pred_region
      %s141 = ssub.s32 128, 128
      %142 = vsyncadd [#allocation4], %s141
      %s144 = sshll.u32 [#allocation7], 4
      %s145 = int_to_ptr.vmem [resolvable:$true] %s144
      %147 = dma.vmem_to_hbm [thread:$0]  %s145, 128, %s2, [#allocation4]
    $region21: #{tpu_custom_call.1} parent=1 // pred_fallthru
      _
    // Predicated region
    $region22: #{tpu_custom_call.1} parent=1 // pred_check
      _
    $region23: #{tpu_custom_call.1} parent=1 // pred_check_branch
      %149 = sbr.rel (0) target = $region25
    $region24: #{tpu_custom_call.1} parent=1 // pred_region
      %150 = dma.done [#allocation4], 128
    $region25: #{tpu_custom_call.1} parent=1 // pred_fallthru
      _
    %151 = vsyncpa [#allocation3], 1
    %152 = vsyncpa [#allocation4], 1
    %153 = vsyncpa [#allocation5], 1

</llo_original>
